<compile_context>
chip_gen: v7x
topology: tpu7x:2x2x1
jax: 0.10.0
libtpu: 0.0.40
codegen_flags: <defaults>
</compile_context>

<pallas_src>
import functools

import jax
import jax.numpy as jnp
from jax.experimental import pallas as pl
from jax.experimental.pallas import tpu as pltpu


_NEG_BIG = -1e30
_INT32_MIN = -(2 ** 31)


def _round_up(x, m):
    return ((x + m - 1) // m) * m


def _online_update(i, j, sim, num_fast_fn, num_masked_fn,
                   m_scr, l_scr, num_scr,
                   *, num_contrast, blk_a, blk_n, pad_cols):
    """Flash-style online-softmax update of the per-anchor running statistics.

    `num_fast_fn(sim)` / `num_masked_fn(sim, logits_mask)` return this tile's
    per-row positive-logit contribution, shape (blk_a, 1) f32.
    """
    nj = pl.num_programs(1)
    m_old = m_scr[...]

    # Slow (masked) path is needed only when the self-contrast diagonal can
    # cross this tile, or when the last contrast tile carries padded columns.
    touches_diag = jnp.logical_and(i * blk_a < (j + 1) * blk_n,
                                   j * blk_n < (i + 1) * blk_a)
    needs_mask = touches_diag
    if pad_cols:
        needs_mask = jnp.logical_or(needs_mask, j == nj - 1)

    @pl.when(jnp.logical_not(needs_mask))
    def _fast():
        # No iotas, no logits_mask, no selects on the denominator path.
        m_new = jnp.maximum(m_old, jnp.max(sim, axis=1, keepdims=True))
        alpha = jnp.exp(m_old - m_new)
        p = jnp.exp(sim - m_new)
        l_scr[...] = l_scr[...] * alpha + jnp.sum(p, axis=1, keepdims=True)
        num_scr[...] = num_scr[...] + num_fast_fn(sim)
        m_scr[...] = m_new

    @pl.when(needs_mask)
    def _masked():
        row = i * blk_a + jax.lax.broadcasted_iota(jnp.int32, (blk_a, blk_n), 0)
        col = j * blk_n + jax.lax.broadcasted_iota(jnp.int32, (blk_a, blk_n), 1)
        lm = jnp.logical_and(row != col, col < num_contrast)
        sim_valid = jnp.where(lm, sim, _NEG_BIG)
        m_new = jnp.maximum(m_old, jnp.max(sim_valid, axis=1, keepdims=True))
        alpha = jnp.exp(m_old - m_new)
        # Masked lanes: exp(-1e30 - finite) == 0, so sim_valid is reused as the
        # exp argument (no second full-tile select needed).
        p = jnp.exp(sim_valid - m_new)
        l_scr[...] = l_scr[...] * alpha + jnp.sum(p, axis=1, keepdims=True)
        num_scr[...] = num_scr[...] + num_masked_fn(sim, lm)
        m_scr[...] = m_new


def _finalize(i, j, pcnt_ref, out_ref, m_scr, l_scr, num_scr,
              *, scale, num_anchor, blk_a):
    @pl.when(j == pl.num_programs(1) - 1)
    def _():
        # log(sum_c lm*exp(sim)) == m + log(l); the row-max subtraction in the
        # reference cancels exactly, so this matches the torch numerics.
        log_denom = m_scr[...] + jnp.log(l_scr[...])
        mean_log_prob_pos = num_scr[...] / pcnt_ref[...] - log_denom
        loss_rows = (-scale) * mean_log_prob_pos
        row_idx = i * blk_a + jax.lax.broadcasted_iota(jnp.int32, (blk_a, 1), 0)
        # Padded anchor rows may accumulate garbage (esp. in the fast path);
        # zero them here so the host-side mean is exact.
        out_ref[...] = jnp.where(row_idx < num_anchor, loss_rows, 0.0)


def _supcon_label_kernel(a_ref, c_ref, al_ref, cl_ref, pcnt_ref, out_ref,
                         m_scr, l_scr, num_scr,
                         *, scale, num_anchor, num_contrast,
                         blk_a, blk_n, pad_cols):
    i = pl.program_id(0)
    j = pl.program_id(1)

    @pl.when(j == 0)
    def _():
        m_scr[...] = jnp.full_like(m_scr, _NEG_BIG)
        l_scr[...] = jnp.zeros_like(l_scr)
        num_scr[...] = jnp.zeros_like(num_scr)

    # 1/temperature is already folded into the anchor features (wrapper); the
    # feature axes of both tiles are contracted directly (no transpose), MXU
    # operands stay in matmul_dtype with f32 accumulation.
    sim = jax.lax.dot_general(
        a_ref[...], c_ref[...],
        dimension_numbers=(((1,), (1,)), ((), ())),
        preferred_element_type=jnp.float32)

    # Positives rebuilt in-kernel from (blk_a,1) x (1,blk_n) int32 label tiles.
    pos = al_ref[...] == cl_ref[...]

    def num_fast(s):
        return jnp.sum(jnp.where(pos, s, 0.0), axis=1, keepdims=True)

    def num_masked(s, lm):
        return jnp.sum(jnp.where(jnp.logical_and(pos, lm), s, 0.0),
                       axis=1, keepdims=True)

    _online_update(i, j, sim, num_fast, num_masked, m_scr, l_scr, num_scr,
                   num_contrast=num_contrast, blk_a=blk_a, blk_n=blk_n,
                   pad_cols=pad_cols)
    _finalize(i, j, pcnt_ref, out_ref, m_scr, l_scr, num_scr,
              scale=scale, num_anchor=num_anchor, blk_a=blk_a)


def _supcon_mask_kernel(a_ref, c_ref, mask_ref, pcnt_ref, out_ref,
                        m_scr, l_scr, num_scr,
                        *, scale, num_anchor, num_contrast,
                        blk_a, blk_n, pad_cols):
    i = pl.program_id(0)
    j = pl.program_id(1)

    @pl.when(j == 0)
    def _():
        m_scr[...] = jnp.full_like(m_scr, _NEG_BIG)
        l_scr[...] = jnp.zeros_like(l_scr)
        num_scr[...] = jnp.zeros_like(num_scr)

    sim = jax.lax.dot_general(
        a_ref[...], c_ref[...],
        dimension_numbers=(((1,), (1,)), ((), ())),
        preferred_element_type=jnp.float32)

    pos_w = mask_ref[...].astype(jnp.float32)   # possibly weighted / asymmetric

    def num_fast(s):
        return jnp.sum(pos_w * s, axis=1, keepdims=True)

    def num_masked(s, lm):
        return jnp.sum(pos_w * jnp.where(lm, s, 0.0), axis=1, keepdims=True)

    _online_update(i, j, sim, num_fast, num_masked, m_scr, l_scr, num_scr,
                   num_contrast=num_contrast, blk_a=blk_a, blk_n=blk_n,
                   pad_cols=pad_cols)
    _finalize(i, j, pcnt_ref, out_ref, m_scr, l_scr, num_scr,
              scale=scale, num_anchor=num_anchor, blk_a=blk_a)


def supcon_loss(features, labels=None, mask=None, *,
                temperature=0.07, contrast_mode='all', base_temperature=0.07,
                block_a=512, block_n=512, matmul_dtype=jnp.bfloat16):
    """Pallas-TPU SupConLoss forward (matches the PyTorch reference).

    matmul_dtype=jnp.bfloat16 feeds the MXU (default, ~1e-3 rel error); pass
    jnp.float32 for tight-accuracy parity at lower throughput.  Binary class
    masks are exact in the bf16 mask stream used by the explicit-mask path.
    """
    features = jnp.asarray(features)
    if features.ndim < 3:
        raise ValueError('`features` needs to be [bsz, n_views, ...]')
    if features.ndim > 3:
        features = features.reshape(features.shape[0], features.shape[1], -1)
    if labels is not None and mask is not None:
        raise ValueError('Cannot define both `labels` and `mask`')
    if block_a % 8 != 0 or block_n % 128 != 0:
        raise ValueError('block_a must be a multiple of 8 and block_n of 128')

    bsz, n_views, feat_dim = features.shape
    contrast_count = n_views

    # torch.cat(torch.unbind(features, dim=1), dim=0): view-major stacking.
    # TODO(synk): express this reordering in the contrast-feature BlockSpec
    # index_map (block (v, b) -> features[b, v, :]) to drop this one-time copy.
    contrast_feature = jnp.transpose(features, (1, 0, 2)).reshape(
        n_views * bsz, feat_dim)

    if contrast_mode == 'one':
        anchor_feature = features[:, 0]
        anchor_count = 1
    elif contrast_mode == 'all':
        anchor_feature = contrast_feature
        anchor_count = contrast_count
    else:
        raise ValueError('Unknown mode: {}'.format(contrast_mode))

    A = anchor_count * bsz
    N = contrast_count * bsz

    d_pad = _round_up(feat_dim, 128)
    itemsize = jnp.dtype(matmul_dtype).itemsize
    mask_path = mask is not None

    # ---- tile selection + VMEM budget (sized to also fit v7x 64 MiB/TC) ----
    blk_a = min(block_a, _round_up(A, 8))
    blk_n = min(block_n, _round_up(N, 128))

    def vmem_est(ba, bn):
        est = 2 * (ba + bn) * d_pad * itemsize      # double-buffered feature tiles
        est += 8 * ba * bn * 4                      # (ba, bn) f32 temporaries headroom
        if mask_path:
            est += 2 * ba * bn * 2                  # bf16 mask double-buffer
        est += 8 * ba * 4 + 4 * bn * 4              # per-row vectors / labels / scratch
        return est

    vmem_cap = 56 * 1024 * 1024
    while vmem_est(blk_a, blk_n) > vmem_cap and blk_n > 256:
        blk_n = _round_up(blk_n // 2, 128)
    while vmem_est(blk_a, blk_n) > vmem_cap and blk_a > 128:
        blk_a = _round_up(blk_a // 2, 8)
    # Megacore: keep >= 2 anchor-row tiles so the "parallel" axis can be split
    # across v7x's two TensorCores instead of idling one of them.
    if _round_up(A, blk_a) // blk_a < 2 and A > 8:
        blk_a = min(blk_a, _round_up((A + 1) // 2, 8))

    a_pad = _round_up(A, blk_a)
    n_pad = _round_up(N, blk_n)
    vmem_limit = int(min(max(vmem_est(blk_a, blk_n) * 5 // 4, 32 * 1024 * 1024),
                         64 * 1024 * 1024))

    def pad2(x, rows, cols):
        return jnp.pad(x, ((0, rows - x.shape[0]), (0, cols - x.shape[1])))

    inv_temp = float(1.0 / temperature)
    # Fold 1/temperature into the f32 -> matmul_dtype cast + pad that already
    # exists (fuses in XLA; frees a blk_a*d_pad VMEM scratch in the kernel).
    anchor_p = pad2(anchor_feature.astype(jnp.float32) * inv_temp,
                    a_pad, d_pad).astype(matmul_dtype)
    contrast_p = pad2(contrast_feature.astype(jnp.float32),
                      n_pad, d_pad).astype(matmul_dtype)

    grid = (a_pad // blk_a, n_pad // blk_n)
    statics = dict(scale=float(temperature / base_temperature),
                   num_anchor=A, num_contrast=N,
                   blk_a=blk_a, blk_n=blk_n, pad_cols=(n_pad != N))

    anchor_spec = pl.BlockSpec((blk_a, d_pad), lambda i, j: (i, 0))
    contrast_spec = pl.BlockSpec((blk_n, d_pad), lambda i, j: (j, 0))
    pcnt_spec = pl.BlockSpec((blk_a, 1), lambda i, j: (i, 0))
    out_spec = pl.BlockSpec((blk_a, 1), lambda i, j: (i, 0))
    scratch = [pltpu.VMEM((blk_a, 1), jnp.float32),   # running max
               pltpu.VMEM((blk_a, 1), jnp.float32),   # running denominator
               pltpu.VMEM((blk_a, 1), jnp.float32)]   # running sum(pos * logits)
    cparams = pltpu.CompilerParams(
        dimension_semantics=("parallel", "arbitrary"),
        vmem_limit_bytes=vmem_limit)
    out_shape = jax.ShapeDtypeStruct((a_pad, 1), jnp.float32)

    if mask_path:
        # General (possibly asymmetric / weighted) user mask: stream its tiles
        # as bf16 (binary class masks are exact; halves HBM traffic vs f32).
        # TODO(synk): express the (anchor_count, contrast_count) repeat via a
        # modular index_map on the small (bsz, bsz) mask so the A x N array is
        # never materialized in HBM.
        mask = jnp.asarray(mask).astype(jnp.float32)
        big_mask = pad2(jnp.tile(mask, (anchor_count, contrast_count)),
                        a_pad, n_pad).astype(jnp.bfloat16)
        pcnt = contrast_count * jnp.sum(mask, axis=1) - jnp.diagonal(mask)
        pcnt = jnp.tile(pcnt, anchor_count)
        in_specs = [anchor_spec, contrast_spec,
                    pl.BlockSpec((blk_a, blk_n), lambda i, j: (i, j)),
                    pcnt_spec]
        kernel = functools.partial(_supcon_mask_kernel, **statics)
        extra_inputs = (big_mask,)
    else:
        if labels is None:
            lab = jnp.arange(bsz, dtype=jnp.int32)     # eye mask == unique labels
        else:
            lab = jnp.asarray(labels).reshape(-1).astype(jnp.int32)
            if lab.shape[0] != bsz:
                raise ValueError('Num of labels does not match num of features')
        lab_contrast = jnp.tile(lab, contrast_count)   # label of contrast row r
        lab_anchor = lab_contrast[:A]                  # label of anchor row r
        same = (lab[:, None] == lab[None, :]).astype(jnp.float32)
        pcnt = contrast_count * jnp.sum(same, axis=1) - 1.0
        pcnt = jnp.tile(pcnt, anchor_count)
        # Distinct pad sentinels; harmless either way because padded anchor
        # rows are zeroed at finalize and padded contrast columns only reach
        # the masked slow path (col < N removes them).
        lab_anchor = jnp.pad(lab_anchor, (0, a_pad - A),
                             constant_values=_INT32_MIN).reshape(a_pad, 1)
        lab_contrast = jnp.pad(lab_contrast, (0, n_pad - N),
                               constant_values=-1).reshape(1, n_pad)
        in_specs = [anchor_spec, contrast_spec,
                    pl.BlockSpec((blk_a, 1), lambda i, j: (i, 0)),
                    pl.BlockSpec((1, blk_n), lambda i, j: (0, j)),
                    pcnt_spec]
        kernel = functools.partial(_supcon_label_kernel, **statics)
        extra_inputs = (lab_anchor, lab_contrast)

    # NOTE: pcnt == 0 (a class seen once with a single view, or a mask row
    # whose only nonzero is the diagonal) yields NaN, mirroring the reference.
    pcnt = jnp.pad(pcnt, (0, a_pad - A), constant_values=1.0).reshape(a_pad, 1)

    out = pl.pallas_call(
        kernel,
        out_shape=out_shape,
        grid_spec=pltpu.PrefetchScalarGridSpec(
            num_scalar_prefetch=0,
            grid=grid,
            in_specs=in_specs,
            out_specs=out_spec,
            scratch_shapes=scratch),
        compiler_params=cparams,
    )(anchor_p, contrast_p, *extra_inputs, pcnt)

    return jnp.sum(out) / A


def _supcon_loss_ref(features, labels=None, mask=None, *,
                     temperature=0.07, contrast_mode='all',
                     base_temperature=0.07, mm_dtype=jnp.float32):
    """Pure-JAX mirror of the PyTorch forward.  `mm_dtype` controls the matmul
    operand precision so the bf16 kernel can also be checked tightly."""
    bsz, n_views, d = features.shape
    if mask is None:
        if labels is None:
            base = jnp.eye(bsz, dtype=jnp.float32)
        else:
            lab = labels.reshape(-1, 1)
            base = (lab == lab.T).astype(jnp.float32)
    else:
        base = mask.astype(jnp.float32)
    contrast = jnp.transpose(features, (1, 0, 2)).reshape(n_views * bsz, d)
    if contrast_mode == 'one':
        anchor, anchor_count = features[:, 0], 1
    else:
        anchor, anchor_count = contrast, n_views
    anchor_scaled = anchor.astype(jnp.float32) * (1.0 / temperature)
    sim = jax.lax.dot_general(
        anchor_scaled.astype(mm_dtype), contrast.astype(mm_dtype),
        dimension_numbers=(((1,), (1,)), ((), ())),
        preferred_element_type=jnp.float32)
    logits = sim - jnp.max(sim, axis=1, keepdims=True)
    big = jnp.tile(base, (anchor_count, n_views))
    A, N = big.shape
    lm = (jnp.arange(N)[None, :] != jnp.arange(A)[:, None]).astype(jnp.float32)
    big = big * lm
    exp_logits = jnp.exp(logits) * lm
    log_prob = logits - jnp.log(exp_logits.sum(1, keepdims=True))
    mlpp = (big * log_prob).sum(1) / big.sum(1)
    loss = -(temperature / base_temperature) * mlpp
    return loss.reshape(anchor_count, bsz).mean()


if __name__ == "__main__":
    key = jax.random.PRNGKey(0)
    kf, kl, km, kf2, kl2, km2 = jax.random.split(key, 6)

    def check(name, got, tight_ref, loose_ref):
        got = jax.block_until_ready(got)
        assert bool(jnp.isfinite(got)), (name, got)
        assert jnp.allclose(got, tight_ref, rtol=1e-3, atol=1e-3), (name, got, tight_ref)
        assert jnp.allclose(got, loose_ref, rtol=5e-2, atol=1e-1), (name, got, loose_ref)

    # Small case: bsz=8, n_views=2, feat_dim=32 (padding, single contrast tile).
    bsz, n_views, feat_dim = 8, 2, 32
    feats = jax.random.normal(kf, (bsz, n_views, feat_dim), dtype=jnp.float32)
    feats = feats / jnp.linalg.norm(feats, axis=-1, keepdims=True)
    labels = jax.random.randint(kl, (bsz,), 0, 3)

    # 1) unsupervised (SimCLR-degenerate): labels=None, mask=None
    check("simclr", supcon_loss(feats),
          _supcon_loss_ref(feats, mm_dtype=jnp.bfloat16),
          _supcon_loss_ref(feats))

    # 2) supervised labels, contrast_mode='all'
    check("labels_all", supcon_loss(feats, labels=labels),
          _supcon_loss_ref(feats, labels=labels, mm_dtype=jnp.bfloat16),
          _supcon_loss_ref(feats, labels=labels))

    # 3) supervised labels, contrast_mode='one'
    check("labels_one",
          supcon_loss(feats, labels=labels, contrast_mode='one'),
          _supcon_loss_ref(feats, labels=labels, contrast_mode='one',
                           mm_dtype=jnp.bfloat16),
          _supcon_loss_ref(feats, labels=labels, contrast_mode='one'))

    # 4) explicit (possibly asymmetric) mask path
    m_rand = (jax.random.uniform(km, (bsz, bsz)) > 0.5).astype(jnp.float32)
    m_rand = jnp.maximum(m_rand, jnp.eye(bsz, dtype=jnp.float32))
    check("explicit_mask", supcon_loss(feats, mask=m_rand),
          _supcon_loss_ref(feats, mask=m_rand, mm_dtype=jnp.bfloat16),
          _supcon_loss_ref(feats, mask=m_rand))

    # 5) multi-tile grid: exercises the mask-free fast path (off-diagonal
    #    tiles), online softmax across contrast tiles, padded columns, and
    #    several anchor-row tiles (incl. the masked last tile).
    bsz2, nv2, d2 = 96, 2, 48
    f2 = jax.random.normal(kf2, (bsz2, nv2, d2), dtype=jnp.float32)
    f2 = f2 / jnp.linalg.norm(f2, axis=-1, keepdims=True)
    lab2 = jax.random.randint(kl2, (bsz2,), 0, 7)
    check("multi_tile_small_blocks",
          supcon_loss(f2, labels=lab2, block_a=64, block_n=128),
          _supcon_loss_ref(f2, labels=lab2, mm_dtype=jnp.bfloat16),
          _supcon_loss_ref(f2, labels=lab2))
    check("multi_tile_default_blocks",
          supcon_loss(f2, labels=lab2),
          _supcon_loss_ref(f2, labels=lab2, mm_dtype=jnp.bfloat16),
          _supcon_loss_ref(f2, labels=lab2))

    # 6) multi-tile explicit-mask path (bf16 mask stream + fast path).
    m2 = (jax.random.uniform(km2, (bsz2, bsz2)) > 0.5).astype(jnp.float32)
    m2 = jnp.maximum(m2, jnp.eye(bsz2, dtype=jnp.float32))
    check("multi_tile_mask",
          supcon_loss(f2, mask=m2, block_a=64, block_n=128),
          _supcon_loss_ref(f2, mask=m2, mm_dtype=jnp.bfloat16),
          _supcon_loss_ref(f2, mask=m2))

    print("KERNEL_OK")
</pallas_src>

<mosaic_0001>
module attributes {stable_mosaic.version = 11 : i64} {
  func.func @_supcon_label_kernel(%arg0: i32, %arg1: i32, %arg2: memref<8x128xbf16, #tpu.memory_space<vmem>>, %arg3: memref<128x128xbf16, #tpu.memory_space<vmem>>, %arg4: memref<8x1xi32, #tpu.memory_space<vmem>>, %arg5: memref<1x128xi32, #tpu.memory_space<vmem>>, %arg6: memref<8x1xf32, #tpu.memory_space<vmem>>, %arg7: memref<8x1xf32, #tpu.memory_space<vmem>>, %arg8: memref<8x1xf32, #tpu.memory_space<vmem>>, %arg9: memref<8x1xf32, #tpu.memory_space<vmem>>, %arg10: memref<8x1xf32, #tpu.memory_space<vmem>>) attributes {dimension_semantics = [#tpu.dimension_semantics<parallel>, #tpu.dimension_semantics<arbitrary>], iteration_bounds = array<i64: 2, 1>, scalar_prefetch = 0 : i64, scratch_operands = 3 : i64, tpu.core_type = #tpu.core_type<tc>, window_params = [{transform_indices = @transform_0, window_bounds = array<i64: 8, 128>}, {transform_indices = @transform_1, window_bounds = array<i64: 128, 128>}, {transform_indices = @transform_2, window_bounds = array<i64: 8, 1>}, {transform_indices = @transform_3, window_bounds = array<i64: 1, 128>}, {transform_indices = @transform_4, window_bounds = array<i64: 8, 1>}, {transform_indices = @transform_5, window_bounds = array<i64: 8, 1>}]} {
    %c0_i32 = arith.constant 0 : i32
    %0 = arith.cmpi eq, %arg1, %c0_i32 : i32
    %1 = arith.extui %0 : i1 to i32
    %c0_i32_0 = arith.constant 0 : i32
    %2 = arith.cmpi ne, %1, %c0_i32_0 : i32
    scf.if %2 {
      %cst_18 = arith.constant -1.000000e+30 : f32
      %31 = vector.broadcast %cst_18 : f32 to vector<8x1xf32>
      %c0_19 = arith.constant 0 : index
      %c0_20 = arith.constant 0 : index
      %32 = vector.load %arg8[%c0_19, %c0_20] : memref<8x1xf32, #tpu.memory_space<vmem>>, vector<8x1xf32>
      tpu.vector_store %arg8[%c0_19, %c0_20], %31 {strides = array<i32>} : memref<8x1xf32, #tpu.memory_space<vmem>>, vector<8x1xf32>,
      %cst_21 = arith.constant 0.000000e+00 : f32
      %33 = vector.broadcast %cst_21 : f32 to vector<8x1xf32>
      %c0_22 = arith.constant 0 : index
      %c0_23 = arith.constant 0 : index
      %34 = vector.load %arg9[%c0_22, %c0_23] : memref<8x1xf32, #tpu.memory_space<vmem>>, vector<8x1xf32>
      tpu.vector_store %arg9[%c0_22, %c0_23], %33 {strides = array<i32>} : memref<8x1xf32, #tpu.memory_space<vmem>>, vector<8x1xf32>,
      %cst_24 = arith.constant 0.000000e+00 : f32
      %35 = vector.broadcast %cst_24 : f32 to vector<8x1xf32>
      %c0_25 = arith.constant 0 : index
      %c0_26 = arith.constant 0 : index
      %36 = vector.load %arg10[%c0_25, %c0_26] : memref<8x1xf32, #tpu.memory_space<vmem>>, vector<8x1xf32>
      tpu.vector_store %arg10[%c0_25, %c0_26], %35 {strides = array<i32>} : memref<8x1xf32, #tpu.memory_space<vmem>>, vector<8x1xf32>,
    } else {
    }
    %c0 = arith.constant 0 : index
    %c0_1 = arith.constant 0 : index
    %3 = vector.load %arg2[%c0, %c0_1] : memref<8x128xbf16, #tpu.memory_space<vmem>>, vector<8x128xbf16>
    %c0_2 = arith.constant 0 : index
    %c0_3 = arith.constant 0 : index
    %4 = vector.load %arg3[%c0_2, %c0_3] : memref<128x128xbf16, #tpu.memory_space<vmem>>, vector<128x128xbf16>
    %cst = arith.constant dense<0.000000e+00> : vector<8x128xf32>
    %5 = tpu.matmul %3, %4, %cst {dimension_numbers = #tpu.dot_dimension_numbers<[1], [1], [0], [0], [0, 0, 1, 0], [], []>} : vector<8x128xbf16>, vector<128x128xbf16>, vector<8x128xf32> -> vector<8x128xf32>
    %c0_4 = arith.constant 0 : index
    %c0_5 = arith.constant 0 : index
    %6 = vector.load %arg4[%c0_4, %c0_5] : memref<8x1xi32, #tpu.memory_space<vmem>>, vector<8x1xi32>
    %c0_6 = arith.constant 0 : index
    %c0_7 = arith.constant 0 : index
    %7 = vector.load %arg5[%c0_6, %c0_7] : memref<1x128xi32, #tpu.memory_space<vmem>>, vector<1x128xi32>
    %8 = vector.broadcast %6 : vector<8x1xi32> to vector<8x128xi32>
    %9 = vector.broadcast %7 : vector<1x128xi32> to vector<8x128xi32>
    %10 = arith.cmpi eq, %8, %9 : vector<8x128xi32>
    %c0_8 = arith.constant 0 : index
    %c0_9 = arith.constant 0 : index
    %11 = vector.load %arg8[%c0_8, %c0_9] : memref<8x1xf32, #tpu.memory_space<vmem>>, vector<8x1xf32>
    %c8_i32 = arith.constant 8 : i32
    %12 = arith.muli %arg0, %c8_i32 : i32
    %c1_i32 = arith.constant 1 : i32
    %13 = arith.addi %arg1, %c1_i32 : i32
    %c128_i32 = arith.constant 128 : i32
    %14 = arith.muli %13, %c128_i32 : i32
    %15 = arith.cmpi slt, %12, %14 : i32
    %c128_i32_10 = arith.constant 128 : i32
    %16 = arith.muli %arg1, %c128_i32_10 : i32
    %c1_i32_11 = arith.constant 1 : i32
    %17 = arith.addi %arg0, %c1_i32_11 : i32
    %c8_i32_12 = arith.constant 8 : i32
    %18 = arith.muli %17, %c8_i32_12 : i32
    %19 = arith.cmpi slt, %16, %18 : i32
    %20 = arith.andi %15, %19 : i1
    %c0_i32_13 = arith.constant 0 : i32
    %21 = arith.cmpi eq, %arg1, %c0_i32_13 : i32
    %22 = arith.ori %20, %21 : i1
    %true = arith.constant true
    %23 = arith.xori %22, %true : i1
    %24 = arith.extui %23 : i1 to i32
    %c0_i32_14 = arith.constant 0 : i32
    %25 = arith.cmpi ne, %24, %c0_i32_14 : i32
    scf.if %25 {
      %cst_18 = arith.constant dense<0xFF800000> : vector<8xf32>
      %31 = vector.multi_reduction <maximumf>, %5, %cst_18 [1] : vector<8x128xf32> to vector<8xf32>
      %32 = vector.shape_cast %31 : vector<8xf32> to vector<8x1xf32>
      %33 = arith.maximumf %11, %32 : vector<8x1xf32>
      %34 = arith.subf %11, %33 : vector<8x1xf32>
      %35 = math.exp %34 : vector<8x1xf32>
      %36 = vector.broadcast %33 : vector<8x1xf32> to vector<8x128xf32>
      %37 = arith.subf %5, %36 : vector<8x128xf32>
      %38 = math.exp %37 : vector<8x128xf32>
      %c0_19 = arith.constant 0 : index
      %c0_20 = arith.constant 0 : index
      %39 = vector.load %arg9[%c0_19, %c0_20] : memref<8x1xf32, #tpu.memory_space<vmem>>, vector<8x1xf32>
      %40 = arith.mulf %39, %35 : vector<8x1xf32>
      %cst_21 = arith.constant dense<0.000000e+00> : vector<8xf32>
      %41 = vector.multi_reduction <add>, %38, %cst_21 [1] : vector<8x128xf32> to vector<8xf32>
      %42 = vector.shape_cast %41 : vector<8xf32> to vector<8x1xf32>
      %43 = arith.addf %40, %42 : vector<8x1xf32>
      %c0_22 = arith.constant 0 : index
      %c0_23 = arith.constant 0 : index
      %44 = vector.load %arg9[%c0_22, %c0_23] : memref<8x1xf32, #tpu.memory_space<vmem>>, vector<8x1xf32>
      tpu.vector_store %arg9[%c0_22, %c0_23], %43 {strides = array<i32>} : memref<8x1xf32, #tpu.memory_space<vmem>>, vector<8x1xf32>,
      %c0_24 = arith.constant 0 : index
      %c0_25 = arith.constant 0 : index
      %45 = vector.load %arg10[%c0_24, %c0_25] : memref<8x1xf32, #tpu.memory_space<vmem>>, vector<8x1xf32>
      %cst_26 = arith.constant 0.000000e+00 : f32
      %46 = vector.broadcast %cst_26 : f32 to vector<8x128xf32>
      %47 = arith.select %10, %5, %46 : vector<8x128xi1>, vector<8x128xf32>
      %cst_27 = arith.constant dense<0.000000e+00> : vector<8xf32>
      %48 = vector.multi_reduction <add>, %47, %cst_27 [1] : vector<8x128xf32> to vector<8xf32>
      %49 = vector.shape_cast %48 : vector<8xf32> to vector<8x1xf32>
      %50 = arith.addf %45, %49 : vector<8x1xf32>
      %c0_28 = arith.constant 0 : index
      %c0_29 = arith.constant 0 : index
      %51 = vector.load %arg10[%c0_28, %c0_29] : memref<8x1xf32, #tpu.memory_space<vmem>>, vector<8x1xf32>
      tpu.vector_store %arg10[%c0_28, %c0_29], %50 {strides = array<i32>} : memref<8x1xf32, #tpu.memory_space<vmem>>, vector<8x1xf32>,
      %c0_30 = arith.constant 0 : index
      %c0_31 = arith.constant 0 : index
      %52 = vector.load %arg8[%c0_30, %c0_31] : memref<8x1xf32, #tpu.memory_space<vmem>>, vector<8x1xf32>
      tpu.vector_store %arg8[%c0_30, %c0_31], %33 {strides = array<i32>} : memref<8x1xf32, #tpu.memory_space<vmem>>, vector<8x1xf32>,
    } else {
    }
    %26 = arith.extui %22 : i1 to i32
    %c0_i32_15 = arith.constant 0 : i32
    %27 = arith.cmpi ne, %26, %c0_i32_15 : i32
    scf.if %27 {
      %c8_i32_18 = arith.constant 8 : i32
      %31 = arith.muli %arg0, %c8_i32_18 : i32
      %32 = tpu.iota {dimensions = array<i32: 0>} : vector<8x128xi32>
      %33 = vector.broadcast %31 : i32 to vector<8x128xi32>
      %34 = arith.addi %33, %32 : vector<8x128xi32>
      %c128_i32_19 = arith.constant 128 : i32
      %35 = arith.muli %arg1, %c128_i32_19 : i32
      %36 = tpu.iota {dimensions = array<i32: 1>} : vector<8x128xi32>
      %37 = vector.broadcast %35 : i32 to vector<8x128xi32>
      %38 = arith.addi %37, %36 : vector<8x128xi32>
      %39 = arith.cmpi ne, %34, %38 : vector<8x128xi32>
      %c16_i32 = arith.constant 16 : i32
      %40 = vector.broadcast %c16_i32 : i32 to vector<8x128xi32>
      %41 = arith.cmpi slt, %38, %40 : vector<8x128xi32>
      %42 = arith.andi %39, %41 : vector<8x128xi1>
      %cst_20 = arith.constant -1.000000e+30 : f32
      %43 = vector.broadcast %cst_20 : f32 to vector<8x128xf32>
      %44 = arith.select %42, %5, %43 : vector<8x128xi1>, vector<8x128xf32>
      %cst_21 = arith.constant dense<0xFF800000> : vector<8xf32>
      %45 = vector.multi_reduction <maximumf>, %44, %cst_21 [1] : vector<8x128xf32> to vector<8xf32>
      %46 = vector.shape_cast %45 : vector<8xf32> to vector<8x1xf32>
      %47 = arith.maximumf %11, %46 : vector<8x1xf32>
      %48 = arith.subf %11, %47 : vector<8x1xf32>
      %49 = math.exp %48 : vector<8x1xf32>
      %50 = vector.broadcast %47 : vector<8x1xf32> to vector<8x128xf32>
      %51 = arith.subf %44, %50 : vector<8x128xf32>
      %52 = math.exp %51 : vector<8x128xf32>
      %c0_22 = arith.constant 0 : index
      %c0_23 = arith.constant 0 : index
      %53 = vector.load %arg9[%c0_22, %c0_23] : memref<8x1xf32, #tpu.memory_space<vmem>>, vector<8x1xf32>
      %54 = arith.mulf %53, %49 : vector<8x1xf32>
      %cst_24 = arith.constant dense<0.000000e+00> : vector<8xf32>
      %55 = vector.multi_reduction <add>, %52, %cst_24 [1] : vector<8x128xf32> to vector<8xf32>
      %56 = vector.shape_cast %55 : vector<8xf32> to vector<8x1xf32>
      %57 = arith.addf %54, %56 : vector<8x1xf32>
      %c0_25 = arith.constant 0 : index
      %c0_26 = arith.constant 0 : index
      %58 = vector.load %arg9[%c0_25, %c0_26] : memref<8x1xf32, #tpu.memory_space<vmem>>, vector<8x1xf32>
      tpu.vector_store %arg9[%c0_25, %c0_26], %57 {strides = array<i32>} : memref<8x1xf32, #tpu.memory_space<vmem>>, vector<8x1xf32>,
      %c0_27 = arith.constant 0 : index
      %c0_28 = arith.constant 0 : index
      %59 = vector.load %arg10[%c0_27, %c0_28] : memref<8x1xf32, #tpu.memory_space<vmem>>, vector<8x1xf32>
      %60 = arith.andi %10, %42 : vector<8x128xi1>
      %cst_29 = arith.constant 0.000000e+00 : f32
      %61 = vector.broadcast %cst_29 : f32 to vector<8x128xf32>
      %62 = arith.select %60, %5, %61 : vector<8x128xi1>, vector<8x128xf32>
      %cst_30 = arith.constant dense<0.000000e+00> : vector<8xf32>
      %63 = vector.multi_reduction <add>, %62, %cst_30 [1] : vector<8x128xf32> to vector<8xf32>
      %64 = vector.shape_cast %63 : vector<8xf32> to vector<8x1xf32>
      %65 = arith.addf %59, %64 : vector<8x1xf32>
      %c0_31 = arith.constant 0 : index
      %c0_32 = arith.constant 0 : index
      %66 = vector.load %arg10[%c0_31, %c0_32] : memref<8x1xf32, #tpu.memory_space<vmem>>, vector<8x1xf32>
      tpu.vector_store %arg10[%c0_31, %c0_32], %65 {strides = array<i32>} : memref<8x1xf32, #tpu.memory_space<vmem>>, vector<8x1xf32>,
      %c0_33 = arith.constant 0 : index
      %c0_34 = arith.constant 0 : index
      %67 = vector.load %arg8[%c0_33, %c0_34] : memref<8x1xf32, #tpu.memory_space<vmem>>, vector<8x1xf32>
      tpu.vector_store %arg8[%c0_33, %c0_34], %47 {strides = array<i32>} : memref<8x1xf32, #tpu.memory_space<vmem>>, vector<8x1xf32>,
    } else {
    }
    %c0_i32_16 = arith.constant 0 : i32
    %28 = arith.cmpi eq, %arg1, %c0_i32_16 : i32
    %29 = arith.extui %28 : i1 to i32
    %c0_i32_17 = arith.constant 0 : i32
    %30 = arith.cmpi ne, %29, %c0_i32_17 : i32
    scf.if %30 {
      %c0_18 = arith.constant 0 : index
      %c0_19 = arith.constant 0 : index
      %31 = vector.load %arg8[%c0_18, %c0_19] : memref<8x1xf32, #tpu.memory_space<vmem>>, vector<8x1xf32>
      %c0_20 = arith.constant 0 : index
      %c0_21 = arith.constant 0 : index
      %32 = vector.load %arg9[%c0_20, %c0_21] : memref<8x1xf32, #tpu.memory_space<vmem>>, vector<8x1xf32>
      %33 = math.log %32 : vector<8x1xf32>
      %34 = arith.addf %31, %33 : vector<8x1xf32>
      %c0_22 = arith.constant 0 : index
      %c0_23 = arith.constant 0 : index
      %35 = vector.load %arg10[%c0_22, %c0_23] : memref<8x1xf32, #tpu.memory_space<vmem>>, vector<8x1xf32>
      %c0_24 = arith.constant 0 : index
      %c0_25 = arith.constant 0 : index
      %36 = vector.load %arg6[%c0_24, %c0_25] : memref<8x1xf32, #tpu.memory_space<vmem>>, vector<8x1xf32>
      %37 = arith.divf %35, %36 : vector<8x1xf32>
      %38 = arith.subf %37, %34 : vector<8x1xf32>
      %cst_26 = arith.constant -1.000000e+00 : f32
      %39 = vector.broadcast %cst_26 : f32 to vector<8x1xf32>
      %40 = arith.mulf %39, %38 : vector<8x1xf32>
      %c8_i32_27 = arith.constant 8 : i32
      %41 = arith.muli %arg0, %c8_i32_27 : i32
      %42 = tpu.iota {dimensions = array<i32: 0>} : vector<8x1xi32>
      %43 = vector.broadcast %41 : i32 to vector<8x1xi32>
      %44 = arith.addi %43, %42 : vector<8x1xi32>
      %c16_i32 = arith.constant 16 : i32
      %45 = vector.broadcast %c16_i32 : i32 to vector<8x1xi32>
      %46 = arith.cmpi slt, %44, %45 : vector<8x1xi32>
      %cst_28 = arith.constant 0.000000e+00 : f32
      %47 = vector.broadcast %cst_28 : f32 to vector<8x1xf32>
      %48 = arith.select %46, %40, %47 : vector<8x1xi1>, vector<8x1xf32>
      %c0_29 = arith.constant 0 : index
      %c0_30 = arith.constant 0 : index
      %49 = vector.load %arg7[%c0_29, %c0_30] : memref<8x1xf32, #tpu.memory_space<vmem>>, vector<8x1xf32>
      tpu.vector_store %arg7[%c0_29, %c0_30], %48 {strides = array<i32>} : memref<8x1xf32, #tpu.memory_space<vmem>>, vector<8x1xf32>,
    } else {
    }
    return
  }
  func.func @transform_0(%arg0: i32, %arg1: i32) -> (i32, i32) {
    %c0_i32 = arith.constant 0 : i32
    %c0_i32_0 = arith.constant 0 : i32
    return %arg0, %c0_i32 : i32, i32
  }
  func.func @transform_1(%arg0: i32, %arg1: i32) -> (i32, i32) {
    %c0_i32 = arith.constant 0 : i32
    %c0_i32_0 = arith.constant 0 : i32
    return %arg1, %c0_i32 : i32, i32
  }
  func.func @transform_2(%arg0: i32, %arg1: i32) -> (i32, i32) {
    %c0_i32 = arith.constant 0 : i32
    %c0_i32_0 = arith.constant 0 : i32
    return %arg0, %c0_i32 : i32, i32
  }
  func.func @transform_3(%arg0: i32, %arg1: i32) -> (i32, i32) {
    %c0_i32 = arith.constant 0 : i32
    %c0_i32_0 = arith.constant 0 : i32
    return %c0_i32, %arg1 : i32, i32
  }
  func.func @transform_4(%arg0: i32, %arg1: i32) -> (i32, i32) {
    %c0_i32 = arith.constant 0 : i32
    %c0_i32_0 = arith.constant 0 : i32
    return %arg0, %c0_i32 : i32, i32
  }
  func.func @transform_5(%arg0: i32, %arg1: i32) -> (i32, i32) {
    %c0_i32 = arith.constant 0 : i32
    %c0_i32_0 = arith.constant 0 : i32
    return %arg0, %c0_i32 : i32, i32
  }
}

</mosaic_0001>

<llo_original>
// kernel: tpu_custom_call.1
$region0: #{tpu_custom_call.1}
  #allocation0 [shape = 'u32[]', space=smem, size = 0x4, offset = 0x4, fixed_abs, tag = 'smem constant byte address 0x4 - core index']
  #allocation1 [shape = 'u32[144,128]{1,0:T(1,128)}', space=vmem, size = 0x12000, scoped, tag = 'internal scratch']
  #allocation2 [shape = 'f32[8,1]{1,0:T(8,128)}', space=vmem, size = 0x1000, scoped, tag = 'scratch operand']
  #allocation3 [shape = 'f32[8,1]{1,0:T(8,128)}', space=vmem, size = 0x1000, scoped, tag = 'scratch operand']
  #allocation4 [shape = 'f32[8,1]{1,0:T(8,128)}', space=vmem, size = 0x1000, scoped, tag = 'scratch operand']
  %s0 = inlined_call_operand.vmem [shape: bf16[16,128], index: 0, kind: input, shape index: {}]
  %s1 = inlined_call_operand.hbm [shape: bf16[128,128], index: 1, kind: input, shape index: {}]
  %s2 = inlined_call_operand.vmem [shape: s32[16,1], index: 2, kind: input, shape index: {}]
  %s3 = inlined_call_operand.vmem [shape: s32[1,128], index: 3, kind: input, shape index: {}]
  %s4 = inlined_call_operand.vmem [shape: f32[16,1], index: 4, kind: input, shape index: {}]
  %s5 = inlined_call_operand.vmem [shape: f32[16,1], index: 5, kind: output, shape index: {}]
  %s6 = sld [smem:[#allocation0]]
  $region73: #{tpu_custom_call.1} parent=0
    _
  %s8 = ssub.s32 1, %s6
  %s9 = scalar_select 0, %s8, %s6
  $region1: #{tpu_custom_call.1} parent=0
    #allocation5 [shape = 'u8[32768]{0}', space=vmem, size = 0x8000, scoped, tag = 'input window, operand 1, single buffered']
    #allocation6 [shape = 's32[2]{0}', space=sflag, size = 0x8, scoped, tag = 'scoped memory for tpu_custom_call.1']
    %10 = vsyncpa [#allocation6], 0
    loop: start=0, step=1, limit=4
    $region2: #{tpu_custom_call.1} parent=1 // loop_pre_header
      _
    $region3: #{tpu_custom_call.1} parent=1 // loop_header
      %s12 = sphi 0, %s16
      %p13 = scmp.ge.s32.totalorder %s12, 4
      %s19 = sphi 0, %s31
      %s20 = sphi 0, %s27
      %s21 = sphi 0, %s19
      %s22 = sphi 0, %s20
      %s23 = sphi 0, %s21
      %s24 = sphi 0, %s22
      %s34 = sphi 0, %s36
      %s37 = sphi 0, %s34
      %s38 = sphi 0, %s37
      %s54 = sphi 0, %s38
      %s60 = sphi 0, %s62
      %s63 = sphi 0, %s60
      %s64 = sphi 0, %s63
      %s80 = sphi 0, %s64
      %s86 = sphi 0, %s88
      %s89 = sphi 0, %s86
      %s90 = sphi 0, %s89
      %s106 = sphi 0, %s90
      %s112 = sphi 0, %s114
      %s115 = sphi 0, %s112
      %s116 = sphi 0, %s115
      %s132 = sphi 0, %s116
      %s138 = sphi 0, %s140
      %s141 = sphi 0, %s138
      %s142 = sphi 0, %s141
      %s158 = sphi 0, %s142
      %s164 = sphi 0, %s166
      %s167 = sphi 0, %s164
      %s168 = sphi 0, %s167
      %s184 = sphi 0, %s168
    $region4: #{tpu_custom_call.1} parent=1 // loop_header_branch
      %15 = sbr.rel (%p13) target = $region8
    $region5: #{tpu_custom_call.1} parent=1 // loop_body
      %s17 = ssub.s32 %s12, 1
      %s18 = ssub.s32 %s12, 2
      %s25 = sadd.s32 1, %s20
      %p26 = scmp.ge.s32.totalorder %s25, 1
      %s27 = scalar_select %p26, 0, %s25
      %s28 = sadd.s32 1, %s19
      %s29 = scalar_select %p26, %s28, %s19
      %p30 = scmp.ge.s32.totalorder %s29, 2
      %s31 = scalar_select %p30, 0, %s29
      %s32 = ssub.s32 %s19, %s31
      %p33 = scmp.eq.s32.totalorder %s32, 0
      %s35 = sadd.s32 %s34, 1
      %s36 = scalar_select %p33, %s34, %s35
      %p39 = pneg %p33
      %p40 = scmp.eq.s32.totalorder %s12, 1
      %p41 = por %p39, %p40
      %p42 = scmp.ne.s32.totalorder %s34, %s37
      %p43 = scmp.eq.s32.totalorder %s12, 0
      %p44 = por %p42, %p43
      %p45 = scmp.ne.s32.totalorder %s34, %s37
      %p46 = scmp.eq.s32.totalorder %s17, 1
      %p47 = por %p45, %p46
      %p48 = scmp.ne.s32.totalorder %s37, %s38
      %p49 = scmp.eq.s32.totalorder %s17, 0
      %p50 = por %p48, %p49
      %p51 = scmp.ne.s32.totalorder %s37, %s38
      %p52 = scmp.eq.s32.totalorder %s18, 1
      %p53 = por %p51, %p52
      %p55 = scmp.ne.s32.totalorder %s38, %s54
      %p56 = scmp.eq.s32.totalorder %s18, 0
      %p57 = por %p55, %p56
      %s58 = ssub.s32 %s20, %s27
      %p59 = scmp.eq.s32.totalorder %s58, 0
      %s61 = sadd.s32 %s60, 1
      %s62 = scalar_select %p59, %s60, %s61
      %p65 = pneg %p59
      %p66 = scmp.eq.s32.totalorder %s12, 1
      %p67 = por %p65, %p66
      %p68 = scmp.ne.s32.totalorder %s60, %s63
      %p69 = scmp.eq.s32.totalorder %s12, 0
      %p70 = por %p68, %p69
      %p71 = scmp.ne.s32.totalorder %s60, %s63
      %p72 = scmp.eq.s32.totalorder %s17, 1
      %p73 = por %p71, %p72
      %p74 = scmp.ne.s32.totalorder %s63, %s64
      %p75 = scmp.eq.s32.totalorder %s17, 0
      %p76 = por %p74, %p75
      %p77 = scmp.ne.s32.totalorder %s63, %s64
      %p78 = scmp.eq.s32.totalorder %s18, 1
      %p79 = por %p77, %p78
      %p81 = scmp.ne.s32.totalorder %s64, %s80
      %p82 = scmp.eq.s32.totalorder %s18, 0
      %p83 = por %p81, %p82
      %s84 = ssub.s32 %s19, %s31
      %p85 = scmp.eq.s32.totalorder %s84, 0
      %s87 = sadd.s32 %s86, 1
      %s88 = scalar_select %p85, %s86, %s87
      %p91 = pneg %p85
      %p92 = scmp.eq.s32.totalorder %s12, 1
      %p93 = por %p91, %p92
      %p94 = scmp.ne.s32.totalorder %s86, %s89
      %p95 = scmp.eq.s32.totalorder %s12, 0
      %p96 = por %p94, %p95
      %p97 = scmp.ne.s32.totalorder %s86, %s89
      %p98 = scmp.eq.s32.totalorder %s17, 1
      %p99 = por %p97, %p98
      %p100 = scmp.ne.s32.totalorder %s89, %s90
      %p101 = scmp.eq.s32.totalorder %s17, 0
      %p102 = por %p100, %p101
      %p103 = scmp.ne.s32.totalorder %s89, %s90
      %p104 = scmp.eq.s32.totalorder %s18, 1
      %p105 = por %p103, %p104
      %p107 = scmp.ne.s32.totalorder %s90, %s106
      %p108 = scmp.eq.s32.totalorder %s18, 0
      %p109 = por %p107, %p108
      %s110 = ssub.s32 %s20, %s27
      %p111 = scmp.eq.s32.totalorder %s110, 0
      %s113 = sadd.s32 %s112, 1
      %s114 = scalar_select %p111, %s112, %s113
      %p117 = pneg %p111
      %p118 = scmp.eq.s32.totalorder %s12, 1
      %p119 = por %p117, %p118
      %p120 = scmp.ne.s32.totalorder %s112, %s115
      %p121 = scmp.eq.s32.totalorder %s12, 0
      %p122 = por %p120, %p121
      %p123 = scmp.ne.s32.totalorder %s112, %s115
      %p124 = scmp.eq.s32.totalorder %s17, 1
      %p125 = por %p123, %p124
      %p126 = scmp.ne.s32.totalorder %s115, %s116
      %p127 = scmp.eq.s32.totalorder %s17, 0
      %p128 = por %p126, %p127
      %p129 = scmp.ne.s32.totalorder %s115, %s116
      %p130 = scmp.eq.s32.totalorder %s18, 1
      %p131 = por %p129, %p130
      %p133 = scmp.ne.s32.totalorder %s116, %s132
      %p134 = scmp.eq.s32.totalorder %s18, 0
      %p135 = por %p133, %p134
      %s136 = ssub.s32 %s19, %s31
      %p137 = scmp.eq.s32.totalorder %s136, 0
      %s139 = sadd.s32 %s138, 1
      %s140 = scalar_select %p137, %s138, %s139
      %p143 = pneg %p137
      %p144 = scmp.eq.s32.totalorder %s12, 1
      %p145 = por %p143, %p144
      %p146 = scmp.ne.s32.totalorder %s138, %s141
      %p147 = scmp.eq.s32.totalorder %s12, 0
      %p148 = por %p146, %p147
      %p149 = scmp.ne.s32.totalorder %s138, %s141
      %p150 = scmp.eq.s32.totalorder %s17, 1
      %p151 = por %p149, %p150
      %p152 = scmp.ne.s32.totalorder %s141, %s142
      %p153 = scmp.eq.s32.totalorder %s17, 0
      %p154 = por %p152, %p153
      %p155 = scmp.ne.s32.totalorder %s141, %s142
      %p156 = scmp.eq.s32.totalorder %s18, 1
      %p157 = por %p155, %p156
      %p159 = scmp.ne.s32.totalorder %s142, %s158
      %p160 = scmp.eq.s32.totalorder %s18, 0
      %p161 = por %p159, %p160
      %s162 = ssub.s32 %s19, %s31
      %p163 = scmp.eq.s32.totalorder %s162, 0
      %s165 = sadd.s32 %s164, 1
      %s166 = scalar_select %p163, %s164, %s165
      %p169 = pneg %p163
      %p170 = scmp.eq.s32.totalorder %s12, 1
      %p171 = por %p169, %p170
      %p172 = scmp.ne.s32.totalorder %s164, %s167
      %p173 = scmp.eq.s32.totalorder %s12, 0
      %p174 = por %p172, %p173
      %p175 = scmp.ne.s32.totalorder %s164, %s167
      %p176 = scmp.eq.s32.totalorder %s17, 1
      %p177 = por %p175, %p176
      %p178 = scmp.ne.s32.totalorder %s167, %s168
      %p179 = scmp.eq.s32.totalorder %s17, 0
      %p180 = por %p178, %p179
      %p181 = scmp.ne.s32.totalorder %s167, %s168
      %p182 = scmp.eq.s32.totalorder %s18, 1
      %p183 = por %p181, %p182
      %p185 = scmp.ne.s32.totalorder %s168, %s184
      %p186 = scmp.eq.s32.totalorder %s18, 0
      %p187 = por %p185, %p186
      %p188 = scmp.le.s32.totalorder 1, %s12
      %p189 = scmp.lt.s32.totalorder %s12, 3
      %p190 = pnand %p188, %p189
      %p191 = pneg %p190
      // Predicated region
      $region9: #{tpu_custom_call.1} parent=5 // pred_check
        _
      $region10: #{tpu_custom_call.1} parent=5 // pred_check_branch
        %193 = sbr.rel (%p190) target = $region12
      $region11: #{tpu_custom_call.1} parent=5 // pred_region
        %s194 = ssub.s32 %s12, 1
        // Predicated region
        $region13: #{tpu_custom_call.1} parent=11 // pred_check
          %p195 = pneg %p76
        $region14: #{tpu_custom_call.1} parent=11 // pred_check_branch
          %197 = sbr.rel (%p195) target = $region16
        $region15: #{tpu_custom_call.1} parent=11 // pred_region
          %s198 = smul.u32 16, %s22
          %s200 = ssub.s32 1024, 1024
          %201 = vsyncadd [#allocation6], %s200
          %s202 = smul.addr %s198, 64
          %s203 = scalar_lea.hbm %s1, %s202
          %s204 = sshll.u32 [#allocation5], 4
          %s205 = int_to_ptr.vmem [resolvable:$true] %s204
          %210 = dma.hbm_to_vmem [thread:$0]  %s203, 1024, %s205, [#allocation6], 64, 64, 4
        $region16: #{tpu_custom_call.1} parent=11 // pred_fallthru
          _
        // Predicated region
        $region17: #{tpu_custom_call.1} parent=11 // pred_check
          %p211 = pneg %p128
        $region18: #{tpu_custom_call.1} parent=11 // pred_check_branch
          %213 = sbr.rel (%p211) target = $region20
        $region19: #{tpu_custom_call.1} parent=11 // pred_region
          %p214 = scmp.lt.s32.totalorder %s22, 0
          %s215 = scalar_select %p214, %s22, 0
          %s216 = scalar_lea.vmem %s3, %s215
        $region20: #{tpu_custom_call.1} parent=11 // pred_fallthru
          _
      $region12: #{tpu_custom_call.1} parent=5 // pred_fallthru
        _
      %p217 = scmp.lt.s32.totalorder %s12, 2
      // Predicated region
      $region21: #{tpu_custom_call.1} parent=5 // pred_check
        %p218 = pneg %p217
      $region22: #{tpu_custom_call.1} parent=5 // pred_check_branch
        %220 = sbr.rel (%p218) target = $region24
      $region23: #{tpu_custom_call.1} parent=5 // pred_region
        // Predicated region
        $region25: #{tpu_custom_call.1} parent=23 // pred_check
          %p221 = pneg %p44
        $region26: #{tpu_custom_call.1} parent=23 // pred_check_branch
          %223 = sbr.rel (%p221) target = $region28
        $region27: #{tpu_custom_call.1} parent=23 // pred_region
          %p224 = scmp.lt.s32.totalorder %s19, 1
          %s225 = scalar_select %p224, %s19, 1
          %s226 = smul.addr %s225, 4
          %s227 = scalar_lea.vmem %s0, %s226
        $region28: #{tpu_custom_call.1} parent=23 // pred_fallthru
          _
        // Predicated region
        $region29: #{tpu_custom_call.1} parent=23 // pred_check
          %p228 = pneg %p96
        $region30: #{tpu_custom_call.1} parent=23 // pred_check_branch
          %230 = sbr.rel (%p228) target = $region32
        $region31: #{tpu_custom_call.1} parent=23 // pred_region
          %p231 = scmp.lt.s32.totalorder %s19, 1
          %s232 = scalar_select %p231, %s19, 1
          %s233 = smul.addr %s232, 8
          %s234 = scalar_lea.vmem %s2, %s233
        $region32: #{tpu_custom_call.1} parent=23 // pred_fallthru
          _
        // Predicated region
        $region33: #{tpu_custom_call.1} parent=23 // pred_check
          %p235 = pneg %p148
        $region34: #{tpu_custom_call.1} parent=23 // pred_check_branch
          %237 = sbr.rel (%p235) target = $region36
        $region35: #{tpu_custom_call.1} parent=23 // pred_region
          %p238 = scmp.lt.s32.totalorder %s19, 1
          %s239 = scalar_select %p238, %s19, 1
          %s240 = smul.addr %s239, 8
          %s241 = scalar_lea.vmem %s4, %s240
        $region36: #{tpu_custom_call.1} parent=23 // pred_fallthru
          _
      $region24: #{tpu_custom_call.1} parent=5 // pred_fallthru
        _
      %p242 = scmp.le.s32.totalorder 1, %s12
      %p243 = scmp.lt.s32.totalorder %s12, 3
      %p244 = pnand %p242, %p243
      %p245 = pneg %p244
      // Predicated region
      $region37: #{tpu_custom_call.1} parent=5 // pred_check
        _
      $region38: #{tpu_custom_call.1} parent=5 // pred_check_branch
        %247 = sbr.rel (%p244) target = $region40
      $region39: #{tpu_custom_call.1} parent=5 // pred_region
        %s248 = ssub.s32 %s12, 1
        // Predicated region
        $region41: #{tpu_custom_call.1} parent=39 // pred_check
          %p249 = pneg %p76
        $region42: #{tpu_custom_call.1} parent=39 // pred_check_branch
          %251 = sbr.rel (%p249) target = $region44
        $region43: #{tpu_custom_call.1} parent=39 // pred_region
          %252 = dma.done [#allocation6], 1024
        $region44: #{tpu_custom_call.1} parent=39 // pred_fallthru
          _
        %p253 = scmp.lt.s32.totalorder %s21, 1
        %s254 = scalar_select %p253, %s21, 1
        %s255 = smul.addr %s254, 4
        %s256 = scalar_lea.vmem %s0, %s255
        %p257 = pneg %p50
        %p258 = pneg %p47
        %p259 = pneg %p76
        %p260 = pneg %p73
        %p261 = scmp.lt.s32.totalorder %s21, 1
        %s262 = scalar_select %p261, %s21, 1
        %s263 = smul.addr %s262, 8
        %s264 = scalar_lea.vmem %s2, %s263
        %p265 = pneg %p102
        %p266 = pneg %p99
        %p267 = scmp.lt.s32.totalorder %s22, 0
        %s268 = scalar_select %p267, %s22, 0
        %s269 = scalar_lea.vmem %s3, %s268
        %p270 = pneg %p128
        %p271 = pneg %p125
        %p272 = scmp.lt.s32.totalorder %s21, 1
        %s273 = scalar_select %p272, %s21, 1
        %s274 = smul.addr %s273, 8
        %s275 = scalar_lea.vmem %s4, %s274
        %p276 = pneg %p154
        %p277 = pneg %p151
        %p278 = pneg %p180
        %p279 = pneg %p177
        %p280 = scmp.lt.s32.totalorder %s21, 1
        %s281 = scalar_select %p280, %s21, 1
        %s282 = smul.addr %s281, 8
        %s283 = scalar_lea.vmem %s5, %s282
        %p284 = scmp.lt.s32.totalorder %s21, 1
        %s285 = scalar_select %p284, %s21, 1
        %s286 = smul.addr %s285, 4
        %s287 = scalar_lea.vmem %s0, %s286
        %s288 = smul.u32 16, %s22
        %p289 = scmp.lt.s32.totalorder %s21, 1
        %s290 = scalar_select %p289, %s21, 1
        %s291 = smul.addr %s290, 8
        %s292 = scalar_lea.vmem %s2, %s291
        %p293 = scmp.lt.s32.totalorder %s22, 0
        %s294 = scalar_select %p293, %s22, 0
        %s295 = scalar_lea.vmem %s3, %s294
        %p296 = scmp.lt.s32.totalorder %s21, 1
        %s297 = scalar_select %p296, %s21, 1
        %s298 = smul.addr %s297, 8
        %s299 = scalar_lea.vmem %s4, %s298
        %p300 = scmp.lt.s32.totalorder %s21, 1
        %s301 = scalar_select %p300, %s21, 1
        %s302 = smul.addr %s301, 8
        %s303 = scalar_lea.vmem %s5, %s302
        %p305 = scmp.eq.s32.totalorder %s22, 0
        // Predicated region
        $region45: #{tpu_custom_call.1} parent=39 // pred_check
          %p306 = pneg %p305
        $region46: #{tpu_custom_call.1} parent=39 // pred_check_branch
          %308 = sbr.rel (%p306) target = $region48
        $region47: #{tpu_custom_call.1} parent=39 // pred_region
          %vm309 = vcmask 7168
          %310 = vst.msk [vmem:[#allocation2] sm:$0xff] %vm309, -1e+30
          %311 = vst.msk [vmem:[#allocation3] sm:$0xff] %vm309, 0.0
          %312 = vst.msk [vmem:[#allocation4] sm:$0xff] %vm309, 0.0
        $region48: #{tpu_custom_call.1} parent=39 // pred_fallthru
          _
        %v313 = vld [vmem:[%s287] sm:$0xf]
        %v314 = vld [vmem:[#allocation5] sm:$0xf]
        %v315 = vld [vmem:[#allocation5 + $0x4] sm:$0xf]
        %v316 = vld [vmem:[#allocation5 + $0x8] sm:$0xf]
        %v317 = vld [vmem:[#allocation5 + $0xc] sm:$0xf]
        %v318 = vld [vmem:[#allocation5 + $0x10] sm:$0xf]
        %v319 = vld [vmem:[#allocation5 + $0x14] sm:$0xf]
        %v320 = vld [vmem:[#allocation5 + $0x18] sm:$0xf]
        %v321 = vld [vmem:[#allocation5 + $0x1c] sm:$0xf]
        %v322 = vld [vmem:[#allocation5 + $0x20] sm:$0xf]
        %v323 = vld [vmem:[#allocation5 + $0x24] sm:$0xf]
        %v324 = vld [vmem:[#allocation5 + $0x28] sm:$0xf]
        %v325 = vld [vmem:[#allocation5 + $0x2c] sm:$0xf]
        %v326 = vld [vmem:[#allocation5 + $0x30] sm:$0xf]
        %v327 = vld [vmem:[#allocation5 + $0x34] sm:$0xf]
        %v328 = vld [vmem:[#allocation5 + $0x38] sm:$0xf]
        %v329 = vld [vmem:[#allocation5 + $0x3c] sm:$0xf]
        %v346 = vunpack.c.l.b16 %v314
        %v347 = vunpack.c.l.b16 %v315
        %v348 = vunpack.c.l.b16 %v316
        %v349 = vunpack.c.l.b16 %v317
        %v350 = vunpack.c.l.b16 %v318
        %v351 = vunpack.c.l.b16 %v319
        %v352 = vunpack.c.l.b16 %v320
        %v353 = vunpack.c.l.b16 %v321
        %v354 = vunpack.c.l.b16 %v322
        %v355 = vunpack.c.l.b16 %v323
        %v356 = vunpack.c.l.b16 %v324
        %v357 = vunpack.c.l.b16 %v325
        %v358 = vunpack.c.l.b16 %v326
        %v359 = vunpack.c.l.b16 %v327
        %v360 = vunpack.c.l.b16 %v328
        %v361 = vunpack.c.l.b16 %v329
        %v362 = vpack.c.b16 %v347, %v346
        %v363 = vpack.c.b16 %v349, %v348
        %v364 = vpack.c.b16 %v351, %v350
        %v365 = vpack.c.b16 %v353, %v352
        %v366 = vpack.c.b16 %v355, %v354
        %v367 = vpack.c.b16 %v357, %v356
        %v368 = vpack.c.b16 %v359, %v358
        %v369 = vpack.c.b16 %v361, %v360
        %378 = vmatprep.subr.bf16.mxu0 0
        %379 = vmatpush1.bf16.xpose.msra.mxu0 %v362
        %380 = vmatprep.subr.bf16.mxu0 0
        %381 = vmatpush1.bf16.xpose.msra.mxu0 %v363
        %382 = vmatprep.subr.bf16.mxu0 0
        %383 = vmatpush1.bf16.xpose.msra.mxu0 %v364
        %384 = vmatprep.subr.bf16.mxu0 0
        %385 = vmatpush1.bf16.xpose.msra.mxu0 %v365
        %386 = vmatprep.subr.bf16.mxu0 0
        %387 = vmatpush1.bf16.xpose.msra.mxu0 %v366
        %388 = vmatprep.subr.bf16.mxu0 0
        %389 = vmatpush1.bf16.xpose.msra.mxu0 %v367
        %390 = vmatprep.subr.bf16.mxu0 0
        %391 = vmatpush1.bf16.xpose.msra.mxu0 %v368
        %392 = vmatprep.subr.bf16.mxu0 0
        %393 = vmatpush1.bf16.xpose.msra.mxu0 %v369
        %394 = vmatprep.subr.bf16.mxu0 0
        %395 = vmatpush1.bf16.xpose.msra.mxu0 0
        %396 = vmatprep.subr.bf16.mxu0 0
        %397 = vmatpush1.bf16.xpose.msra.mxu0 0
        %398 = vmatprep.subr.bf16.mxu0 0
        %399 = vmatpush1.bf16.xpose.msra.mxu0 0
        %400 = vmatprep.subr.bf16.mxu0 0
        %401 = vmatpush1.bf16.xpose.msra.mxu0 0
        %402 = vmatprep.subr.bf16.mxu0 0
        %403 = vmatpush1.bf16.xpose.msra.mxu0 0
        %404 = vmatprep.subr.bf16.mxu0 0
        %405 = vmatpush1.bf16.xpose.msra.mxu0 0
        %406 = vmatprep.subr.bf16.mxu0 0
        %407 = vmatpush1.bf16.xpose.msra.mxu0 0
        %408 = vmatprep.subr.bf16.mxu0 0
        %409 = vmatpush1.bf16.xpose.msra.mxu0 0
        %410 = vmatprep.mubr.bf16.mxu0 0
        %411 = vmatmul.mubr.bf16.gmra.mrb[0].mxu0 %v313
        %v412 = vpop.f32.mrb[0].mxu0
        %v413 = vadd.f32 0.0, %v412
        %v414 = vpop.f32.mrb[0].mxu0
        %v415 = vpop.f32.mrb[0].mxu0
        %v416 = vpop.f32.mrb[0].mxu0
        %417 = vdwg.mxu0
        %v418 = vld [vmem:[%s292] sm:$0xff]
        %v419 = vld [vmem:[%s295] sm:$0x1]
        %420 = vset.pattern.permute.xlu0 0
        %421 = vperm.xlu0 %420, %v418
        %v422 = vpop.permute.xlu0 %421
        %v423 = vlaneseq
        %v424 = vshrl.u32 %v423, 7
        %v425 = vsub.s32 0, %v424
        %v426 = vrot.slane %v419, %v425
        %vm427 = vcmp.eq.s32.totalorder %v422, %v426
        %v428 = vld [vmem:[#allocation2] sm:$0xff]
        %s429 = smul.u32 %s21, 8
        %s430 = sadd.s32 %s22, 1
        %s431 = smul.u32 %s430, 128
        %p432 = scmp.lt.s32.totalorder %s429, %s431
        %s433 = smul.u32 %s22, 128
        %s434 = sadd.s32 %s21, 1
        %s435 = smul.u32 %s434, 8
        %p436 = scmp.lt.s32.totalorder %s433, %s435
        %p437 = pnand %p432, %p436
        %p438 = pneg %p437
        %p439 = por %p438, %p305
        // Predicated region
        $region49: #{tpu_custom_call.1} parent=39 // pred_check
          %p440 = pneg %p439
        $region50: #{tpu_custom_call.1} parent=39 // pred_check_branch
          %442 = sbr.rel (%p440) target = $region52
        $region51: #{tpu_custom_call.1} parent=39 // pred_region
          %v443 = vlaneseq
          %v444 = vshrl.u32 %v443, 7
          %v445 = vstv %s429
          %v446 = vadd.s32 %v445, %v444
          %v447 = vlaneseq
          %v448 = vand.u32 %v447, 127
          %v449 = vstv %s433
          %v450 = vadd.s32 %v449, %v448
          %vm451 = vcmp.ne.s32.totalorder %v446, %v450
          %vm452 = vcmp.lt.s32.totalorder %v450, 16
          %vm453 = vmand %vm451, %vm452
          %v454 = vsel %vm453, %v413, -1e+30
          %455 = vmax.xlane.f32.xlu0 %v454
          %v456 = vpop.xlane.xlu0 %455
          %v457 = vmax.f32 %v428, %v456
          %v458 = vsub.f32 %v428, %v457
          %v459 = vmul.f32 %v458, 1.442695
          %v460 = vpow.pop %v459
          %462 = vset.pattern.permute.xlu0 0
          %463 = vperm.xlu0 %462, %v457
          %v464 = vpop.permute.xlu0 %463
          %v466 = vsub.f32 %v454, %v464
          %v467 = vmul.f32 %v466, 1.442695
          %v468 = vpow.pop %v467
          %v469 = vld [vmem:[#allocation3] sm:$0xff]
          %v470 = vmul.f32 %v469, %v460
          %471 = vadd.xlane.f32.xlu0 %v468
          %v472 = vpop.xlane.xlu0 %471
          %v473 = vadd.f32 %v470, %v472
          %vm474 = vcmask 7168
          %475 = vst.msk [vmem:[#allocation3] sm:$0xff] %vm474, %v473
          %v476 = vld [vmem:[#allocation4] sm:$0xff]
          %vm477 = vmand %vm427, %vm453
          %v478 = vsel %vm477, %v413, 0.0
          %479 = vadd.xlane.f32.xlu0 %v478
          %v480 = vpop.xlane.xlu0 %479
          %v481 = vadd.f32 %v476, %v480
          %482 = vst.msk [vmem:[#allocation4] sm:$0xff] %vm474, %v481
          %483 = vst.msk [vmem:[#allocation2] sm:$0xff] %vm474, %v457
        $region52: #{tpu_custom_call.1} parent=39 // pred_fallthru
          _
        %p484 = pneg %p439
        // Predicated region
        $region53: #{tpu_custom_call.1} parent=39 // pred_check
          _
        $region54: #{tpu_custom_call.1} parent=39 // pred_check_branch
          %486 = sbr.rel (%p439) target = $region56
        $region55: #{tpu_custom_call.1} parent=39 // pred_region
          %487 = vmax.xlane.f32.xlu0 %v413
          %v488 = vpop.xlane.xlu0 %487
          %v489 = vmax.f32 %v428, %v488
          %v490 = vsub.f32 %v428, %v489
          %v491 = vmul.f32 %v490, 1.442695
          %v492 = vpow.pop %v491
          %494 = vset.pattern.permute.xlu0 0
          %495 = vperm.xlu0 %494, %v489
          %v496 = vpop.permute.xlu0 %495
          %v498 = vsub.f32 %v413, %v496
          %v499 = vmul.f32 %v498, 1.442695
          %v500 = vpow.pop %v499
          %v501 = vld [vmem:[#allocation3] sm:$0xff]
          %v502 = vmul.f32 %v501, %v492
          %503 = vadd.xlane.f32.xlu0 %v500
          %v504 = vpop.xlane.xlu0 %503
          %v505 = vadd.f32 %v502, %v504
          %vm506 = vcmask 7168
          %507 = vst.msk [vmem:[#allocation3] sm:$0xff] %vm506, %v505
          %v508 = vld [vmem:[#allocation4] sm:$0xff]
          %v509 = vsel %vm427, %v413, 0.0
          %510 = vadd.xlane.f32.xlu0 %v509
          %v511 = vpop.xlane.xlu0 %510
          %v512 = vadd.f32 %v508, %v511
          %513 = vst.msk [vmem:[#allocation4] sm:$0xff] %vm506, %v512
          %514 = vst.msk [vmem:[#allocation2] sm:$0xff] %vm506, %v489
        $region56: #{tpu_custom_call.1} parent=39 // pred_fallthru
          _
        // Predicated region
        $region57: #{tpu_custom_call.1} parent=39 // pred_check
          %p515 = pneg %p305
        $region58: #{tpu_custom_call.1} parent=39 // pred_check_branch
          %517 = sbr.rel (%p515) target = $region60
        $region59: #{tpu_custom_call.1} parent=39 // pred_region
          %v518 = vld [vmem:[#allocation2] sm:$0xff]
          %v519 = vld [vmem:[#allocation3] sm:$0xff]
          %v520 = vlog2.pop %v519
          %v521 = vmul.f32 %v520, 0.6931472
          %v522 = vadd.f32 %v518, %v521
          %v523 = vld [vmem:[#allocation4] sm:$0xff]
          %v524 = vld [vmem:[%s299] sm:$0xff]
          %v525 = vrcp.pop %v524
          %v526 = vmul.f32 %v523, %v525
          %v527 = vsub.f32 %v526, %v522
          %v528 = vmul.f32 %v527, -1.0
          %v529 = vlaneseq
          %v530 = vshrl.u32 %v529, 7
          %v531 = vstv %s429
          %v532 = vadd.s32 %v531, %v530
          %vm533 = vcmp.lt.s32.totalorder %v532, 16
          %v534 = vsel %vm533, %v528, 0.0
          %vm535 = vcmask 7168
          %536 = vst.msk [vmem:[%s303] sm:$0xff] %vm535, %v534
        $region60: #{tpu_custom_call.1} parent=39 // pred_fallthru
          _
        %p537 = scmp.lt.s32.totalorder %s21, 1
        %s538 = scalar_select %p537, %s21, 1
        %s539 = smul.addr %s538, 8
        %s540 = scalar_lea.vmem %s5, %s539
        // Predicated region
        $region61: #{tpu_custom_call.1} parent=39 // pred_check
          %p541 = pneg %p177
        $region62: #{tpu_custom_call.1} parent=39 // pred_check_branch
          %543 = sbr.rel (%p541) target = $region64
        $region63: #{tpu_custom_call.1} parent=39 // pred_region
          _
        $region64: #{tpu_custom_call.1} parent=39 // pred_fallthru
          _
      $region40: #{tpu_custom_call.1} parent=5 // pred_fallthru
        _
      %p544 = scmp.le.s32.totalorder 2, %s12
      // Predicated region
      $region65: #{tpu_custom_call.1} parent=5 // pred_check
        %p545 = pneg %p544
      $region66: #{tpu_custom_call.1} parent=5 // pred_check_branch
        %547 = sbr.rel (%p545) target = $region68
      $region67: #{tpu_custom_call.1} parent=5 // pred_region
        %s548 = ssub.s32 %s12, 2
        // Predicated region
        $region69: #{tpu_custom_call.1} parent=67 // pred_check
          %p549 = pneg %p183
        $region70: #{tpu_custom_call.1} parent=67 // pred_check_branch
          %551 = sbr.rel (%p549) target = $region72
        $region71: #{tpu_custom_call.1} parent=67 // pred_region
          %p552 = scmp.lt.s32.totalorder %s23, 1
          %s553 = scalar_select %p552, %s23, 1
          %s554 = smul.addr %s553, 8
          %s555 = scalar_lea.vmem %s5, %s554
        $region72: #{tpu_custom_call.1} parent=67 // pred_fallthru
          _
      $region68: #{tpu_custom_call.1} parent=5 // pred_fallthru
        _
    $region6: #{tpu_custom_call.1} parent=1 // loop_footer
      %s16 = sadd.s32 1, %s12
    $region7: #{tpu_custom_call.1} parent=1 // loop_footer_branch
      %11 = sbr.rel target = $region3
    $region8: #{tpu_custom_call.1} parent=1 // loop_exit
      _
    %556 = vsyncpa [#allocation6], 1
    %s557 = scalar_lea.sflag [#allocation6], 1
    %558 = vsyncpa %s557, 1

</llo_original>
